<compile_context>
chip_gen: v6e
topology: v6e:2x2x1
jax: 0.10.0
libtpu: 0.0.40
codegen_flags: <defaults>
</compile_context>

<pallas_src>
import jax
import jax.numpy as jnp
import numpy as np
from jax.experimental import pallas as pl
from jax.experimental.pallas import tpu as pltpu


# --------------------------- host-side constants -----------------------------

def _up2_matrix(n):
    """(2n, n) matrix for 1-D bilinear x2 upsample, align_corners=False."""
    u = np.zeros((2 * n, n), dtype=np.float64)
    for p in range(2 * n):
        j = p // 2
        if p % 2 == 0:
            u[p, max(j - 1, 0)] += 0.25
            u[p, j] += 0.75
        else:
            u[p, j] += 0.75
            u[p, min(j + 1, n - 1)] += 0.25
    return u


def _up_total_matrix(n, stages):
    """Composition of `stages` successive x2 upsamples: (n * 2**stages, n).

    All entries are dyadic rationals exactly representable in f32, so this
    pre-composition is numerically exact vs applying the stages sequentially.
    """
    m = np.eye(n, dtype=np.float64)
    size = n
    for _ in range(stages):
        m = _up2_matrix(size) @ m
        size *= 2
    return m.astype(np.float32)


# --------------------------- fused Pallas kernel ------------------------------

def _make_decoder_kernel(n_layers, nb, out_dim, c_in, H, W):
    """Fused (5 x conv1x1 at base res) + composed x16 bilinear upsample."""
    P = nb * out_dim              # planes produced per grid step
    S = H * W

    def kernel(*refs):
        x_ref = refs[0]                                   # (nb, c_in, S) VMEM
        w_refs = refs[1:1 + n_layers]                     # (nb*cout, nb*cin) VMEM
        b_refs = refs[1 + n_layers:1 + 2 * n_layers]      # (nb*cout, 1)     VMEM
        uh_ref = refs[1 + 2 * n_layers]                   # (16H, H)         VMEM
        uwt_ref = refs[2 + 2 * n_layers]                  # (W, 16W)         VMEM
        out_ref = refs[3 + 2 * n_layers]                  # (nb, out_dim, 16H, 16W)

        # ---- all channel mixing at the base HxW resolution (conv commutes
        #      with the upsamples).  One 2-D MXU dot per layer; the batch tile
        #      rides in the M/K dims via the block-diagonal weights.
        a = x_ref[...].reshape(nb * c_in, S)              # leading-dim merge only
        for i in range(n_layers):
            a = jnp.dot(w_refs[i][...], a,
                        preferred_element_type=jnp.float32) + b_refs[i][...]
        # a: (nb*out_dim, S), rows ordered (n, o), columns ordered (h, w).

        # ---- repack (plane, h*W + w) -> (plane*H + h, w) using only static
        #      lane slices + a sublane stack (avoids an unsupported-reshape
        #      style lane-split).
        chunks = [a[:, h * W:(h + 1) * W] for h in range(H)]   # H x (P, W)
        z = jnp.stack(chunks, axis=1).reshape(P * H, W)        # (P*H, W)

        # ---- lane-direction (W) x16 upsample FIRST: one stacked dot for all
        #      planes, lane-dense (P*H, 16W) result.
        zw = jnp.dot(z, uwt_ref[...], preferred_element_type=jnp.float32)

        # ---- sublane-direction (H) x16 upsample per plane: (16H,H)@(H,16W),
        #      stored as fully lane-dense (128,128)-style unmasked writes.
        uh = uh_ref[...]
        for p in range(P):
            n, o = divmod(p, out_dim)
            plane = jnp.dot(uh, zw[p * H:(p + 1) * H, :],
                            preferred_element_type=jnp.float32)
            out_ref[n, o, :, :] = plane.astype(out_ref.dtype)

    return kernel


def _pick_block_batch(n, max_nb=8):
    """Largest divisor of n that is <= max_nb while keeping >=2 grid steps
    (so both v7x TensorCores get work when n >= 2)."""
    if n <= 1:
        return 1
    best = 1
    for nb in range(1, min(max_nb, n // 2) + 1):
        if n % nb == 0:
            best = nb
    return best


@jax.jit
def conv_decoder_forward(x_nchw, params):
    """ConvDecoder forward. x_nchw: (N, C_in, H, W) f32 -> (N, out_dim, 16H, 16W).

    params: list of (w, b) with w of shape (c_in, c_out) (PyTorch Conv2d
    weights (out, in, 1, 1) must be transposed/squeezed before use).
    """
    N, c_in, H, W = x_nchw.shape
    L = len(params)
    chans = tuple((int(w.shape[0]), int(w.shape[1])) for (w, _) in params)
    assert chans[0][0] == c_in
    out_dim = chans[-1][1]
    stages = L - 1                       # number of x2 upsamples
    scale = 2 ** stages
    HO, WO = H * scale, W * scale
    S = H * W

    Nb = _pick_block_batch(N)
    grid = N // Nb

    # Block-diagonal per-layer weights / biases so each conv layer is a single
    # 2-D matmul over the whole Nb batch tile (exact: kron with identity).
    eye_nb = jnp.eye(Nb, dtype=jnp.float32)
    w_big = [jnp.kron(eye_nb, w.astype(jnp.float32).T) for (w, _) in params]
    b_big = [jnp.tile(b.astype(jnp.float32).reshape(-1, 1), (Nb, 1))
             for (_, b) in params]

    # Pre-composed x16 bilinear matrices (exact dyadic entries).
    uh = jnp.asarray(_up_total_matrix(H, stages))        # (16H, H)
    uwt = jnp.asarray(_up_total_matrix(W, stages).T)     # (W, 16W)

    x3 = x_nchw.reshape(N, c_in, S).astype(jnp.float32)  # metadata-only reshape

    kernel = _make_decoder_kernel(L, Nb, out_dim, c_in, H, W)

    in_specs = [pl.BlockSpec((Nb, c_in, S), lambda b: (b, 0, 0))]
    for m in list(w_big) + list(b_big) + [uh, uwt]:
        in_specs.append(pl.BlockSpec(m.shape, lambda b: (0, 0)))

    return pl.pallas_call(
        kernel,
        out_shape=jax.ShapeDtypeStruct((N, out_dim, HO, WO), x_nchw.dtype),
        grid_spec=pltpu.PrefetchScalarGridSpec(
            num_scalar_prefetch=0,
            grid=(grid,),
            in_specs=in_specs,
            out_specs=pl.BlockSpec((Nb, out_dim, HO, WO),
                                   lambda b: (b, 0, 0, 0)),
        ),
        compiler_params=pltpu.CompilerParams(
            dimension_semantics=("parallel",)),
    )(x3, *w_big, *b_big, uh, uwt)


# --------------------------- params ------------------------------------------

def init_params(key, input_dim, output_dim=1):
    """Deterministic Conv2d-like init (uniform +- 1/sqrt(fan_in)), w: (cin, cout)."""
    c1 = input_dim // 2
    c2 = input_dim // 4
    in_ch = [input_dim, c1, c1, c2, c2]
    out_ch = [c1, c1, c2, c2, output_dim]
    params = []
    for ci, co in zip(in_ch, out_ch):
        key, kw, kb = jax.random.split(key, 3)
        bound = 1.0 / np.sqrt(ci)
        w = jax.random.uniform(kw, (ci, co), jnp.float32, -bound, bound)
        b = jax.random.uniform(kb, (co,), jnp.float32, -bound, bound)
        params.append((w, b))
    return params


# --------------------------- pure-JAX reference -------------------------------

def _ref_upsample2x(x):
    def blend_axis(x, axis):
        prev = jnp.concatenate(
            [jax.lax.slice_in_dim(x, 0, 1, axis=axis),
             jax.lax.slice_in_dim(x, 0, x.shape[axis] - 1, axis=axis)], axis)
        nxt = jnp.concatenate(
            [jax.lax.slice_in_dim(x, 1, x.shape[axis], axis=axis),
             jax.lax.slice_in_dim(x, x.shape[axis] - 1, x.shape[axis],
                                  axis=axis)], axis)
        ev = 0.25 * prev + 0.75 * x
        od = 0.75 * x + 0.25 * nxt
        out = jnp.stack([ev, od], axis=axis + 1)
        new_shape = list(x.shape)
        new_shape[axis] *= 2
        return out.reshape(new_shape)
    x = blend_axis(x, 1)
    x = blend_axis(x, 2)
    return x


def ref_forward(x_nchw, params):
    """Layer-by-layer reference with the original conv/upsample interleaving."""
    x = jnp.transpose(x_nchw, (0, 2, 3, 1))
    for i, (w, b) in enumerate(params):
        x = jnp.einsum('nhwc,co->nhwo', x, w) + b
        if i != len(params) - 1:
            x = _ref_upsample2x(x)
    return jnp.transpose(x, (0, 3, 1, 2))


# --------------------------- main ---------------------------------------------

if __name__ == "__main__":
    key = jax.random.PRNGKey(0)
    k_x, k_p = jax.random.split(key)

    N, C_IN, H, W = 2, 16, 8, 8          # input_dim=16 -> intermediates 8, 4
    OUT_DIM = 1
    x = jax.random.normal(k_x, (N, C_IN, H, W), jnp.float32)
    params = init_params(k_p, C_IN, OUT_DIM)

    out = jax.block_until_ready(conv_decoder_forward(x, params))

    expected_shape = (N, OUT_DIM, H * 16, W * 16)
    assert out.shape == expected_shape, (out.shape, expected_shape)

    ref = jax.block_until_ready(ref_forward(x, params))
    # Kernel commutes the 1x1 convs below the (pre-composed) upsamples, so
    # differences vs the interleaved reference are FP-reordering only.
    np.testing.assert_allclose(np.asarray(out), np.asarray(ref),
                               rtol=1e-5, atol=2e-5)

    print("KERNEL_OK")
</pallas_src>

<mosaic_0001>
module attributes {stable_mosaic.version = 11 : i64} {
  func.func @kernel(%arg0: i32, %arg1: memref<1x16x64xf32, #tpu.memory_space<vmem>>, %arg2: memref<8x16xf32, #tpu.memory_space<vmem>>, %arg3: memref<8x8xf32, #tpu.memory_space<vmem>>, %arg4: memref<4x8xf32, #tpu.memory_space<vmem>>, %arg5: memref<4x4xf32, #tpu.memory_space<vmem>>, %arg6: memref<1x4xf32, #tpu.memory_space<vmem>>, %arg7: memref<8x1xf32, #tpu.memory_space<vmem>>, %arg8: memref<8x1xf32, #tpu.memory_space<vmem>>, %arg9: memref<4x1xf32, #tpu.memory_space<vmem>>, %arg10: memref<4x1xf32, #tpu.memory_space<vmem>>, %arg11: memref<1x1xf32, #tpu.memory_space<vmem>>, %arg12: memref<128x8xf32, #tpu.memory_space<vmem>>, %arg13: memref<8x128xf32, #tpu.memory_space<vmem>>, %arg14: memref<1x1x128x128xf32, #tpu.memory_space<vmem>>) attributes {dimension_semantics = [#tpu.dimension_semantics<parallel>], iteration_bounds = array<i64: 2>, scalar_prefetch = 0 : i64, scratch_operands = 0 : i64, tpu.core_type = #tpu.core_type<tc>, window_params = [{transform_indices = @transform_0, window_bounds = array<i64: 1, 16, 64>}, {pipeline_mode = #tpu.pipeline_mode<synchronous>, transform_indices = @transform_1, window_bounds = array<i64: 8, 16>}, {pipeline_mode = #tpu.pipeline_mode<synchronous>, transform_indices = @transform_2, window_bounds = array<i64: 8, 8>}, {pipeline_mode = #tpu.pipeline_mode<synchronous>, transform_indices = @transform_3, window_bounds = array<i64: 4, 8>}, {pipeline_mode = #tpu.pipeline_mode<synchronous>, transform_indices = @transform_4, window_bounds = array<i64: 4, 4>}, {pipeline_mode = #tpu.pipeline_mode<synchronous>, transform_indices = @transform_5, window_bounds = array<i64: 1, 4>}, {pipeline_mode = #tpu.pipeline_mode<synchronous>, transform_indices = @transform_6, window_bounds = array<i64: 8, 1>}, {pipeline_mode = #tpu.pipeline_mode<synchronous>, transform_indices = @transform_7, window_bounds = array<i64: 8, 1>}, {pipeline_mode = #tpu.pipeline_mode<synchronous>, transform_indices = @transform_8, window_bounds = array<i64: 4, 1>}, {pipeline_mode = #tpu.pipeline_mode<synchronous>, transform_indices = @transform_9, window_bounds = array<i64: 4, 1>}, {pipeline_mode = #tpu.pipeline_mode<synchronous>, transform_indices = @transform_10, window_bounds = array<i64: 1, 1>}, {pipeline_mode = #tpu.pipeline_mode<synchronous>, transform_indices = @transform_11, window_bounds = array<i64: 128, 8>}, {pipeline_mode = #tpu.pipeline_mode<synchronous>, transform_indices = @transform_12, window_bounds = array<i64: 8, 128>}, {transform_indices = @transform_13, window_bounds = array<i64: 1, 1, 128, 128>}]} {
    %c0 = arith.constant 0 : index
    %c0_0 = arith.constant 0 : index
    %c0_1 = arith.constant 0 : index
    %0 = vector.load %arg1[%c0, %c0_0, %c0_1] : memref<1x16x64xf32, #tpu.memory_space<vmem>>, vector<1x16x64xf32>
    %1 = vector.shape_cast %0 : vector<1x16x64xf32> to vector<16x64xf32>
    %c0_2 = arith.constant 0 : index
    %c0_3 = arith.constant 0 : index
    %2 = vector.load %arg2[%c0_2, %c0_3] : memref<8x16xf32, #tpu.memory_space<vmem>>, vector<8x16xf32>
    %cst = arith.constant dense<0.000000e+00> : vector<8x64xf32>
    %3 = tpu.matmul %2, %1, %cst {dimension_numbers = #tpu.dot_dimension_numbers<[1], [0], [0], [1], [0, 0, 1, 1], [], []>} : vector<8x16xf32>, vector<16x64xf32>, vector<8x64xf32> -> vector<8x64xf32>
    %c0_4 = arith.constant 0 : index
    %c0_5 = arith.constant 0 : index
    %4 = vector.load %arg7[%c0_4, %c0_5] : memref<8x1xf32, #tpu.memory_space<vmem>>, vector<8x1xf32>
    %5 = vector.broadcast %4 : vector<8x1xf32> to vector<8x64xf32>
    %6 = arith.addf %3, %5 : vector<8x64xf32>
    %c0_6 = arith.constant 0 : index
    %c0_7 = arith.constant 0 : index
    %7 = vector.load %arg3[%c0_6, %c0_7] : memref<8x8xf32, #tpu.memory_space<vmem>>, vector<8x8xf32>
    %cst_8 = arith.constant dense<0.000000e+00> : vector<8x64xf32>
    %8 = tpu.matmul %7, %6, %cst_8 {dimension_numbers = #tpu.dot_dimension_numbers<[1], [0], [0], [1], [0, 0, 1, 1], [], []>} : vector<8x8xf32>, vector<8x64xf32>, vector<8x64xf32> -> vector<8x64xf32>
    %c0_9 = arith.constant 0 : index
    %c0_10 = arith.constant 0 : index
    %9 = vector.load %arg8[%c0_9, %c0_10] : memref<8x1xf32, #tpu.memory_space<vmem>>, vector<8x1xf32>
    %10 = vector.broadcast %9 : vector<8x1xf32> to vector<8x64xf32>
    %11 = arith.addf %8, %10 : vector<8x64xf32>
    %c0_11 = arith.constant 0 : index
    %c0_12 = arith.constant 0 : index
    %12 = vector.load %arg4[%c0_11, %c0_12] : memref<4x8xf32, #tpu.memory_space<vmem>>, vector<4x8xf32>
    %cst_13 = arith.constant dense<0.000000e+00> : vector<4x64xf32>
    %13 = tpu.matmul %12, %11, %cst_13 {dimension_numbers = #tpu.dot_dimension_numbers<[1], [0], [0], [1], [0, 0, 1, 1], [], []>} : vector<4x8xf32>, vector<8x64xf32>, vector<4x64xf32> -> vector<4x64xf32>
    %c0_14 = arith.constant 0 : index
    %c0_15 = arith.constant 0 : index
    %14 = vector.load %arg9[%c0_14, %c0_15] : memref<4x1xf32, #tpu.memory_space<vmem>>, vector<4x1xf32>
    %15 = vector.broadcast %14 : vector<4x1xf32> to vector<4x64xf32>
    %16 = arith.addf %13, %15 : vector<4x64xf32>
    %c0_16 = arith.constant 0 : index
    %c0_17 = arith.constant 0 : index
    %17 = vector.load %arg5[%c0_16, %c0_17] : memref<4x4xf32, #tpu.memory_space<vmem>>, vector<4x4xf32>
    %cst_18 = arith.constant dense<0.000000e+00> : vector<4x64xf32>
    %18 = tpu.matmul %17, %16, %cst_18 {dimension_numbers = #tpu.dot_dimension_numbers<[1], [0], [0], [1], [0, 0, 1, 1], [], []>} : vector<4x4xf32>, vector<4x64xf32>, vector<4x64xf32> -> vector<4x64xf32>
    %c0_19 = arith.constant 0 : index
    %c0_20 = arith.constant 0 : index
    %19 = vector.load %arg10[%c0_19, %c0_20] : memref<4x1xf32, #tpu.memory_space<vmem>>, vector<4x1xf32>
    %20 = vector.broadcast %19 : vector<4x1xf32> to vector<4x64xf32>
    %21 = arith.addf %18, %20 : vector<4x64xf32>
    %c0_21 = arith.constant 0 : index
    %c0_22 = arith.constant 0 : index
    %22 = vector.load %arg6[%c0_21, %c0_22] : memref<1x4xf32, #tpu.memory_space<vmem>>, vector<1x4xf32>
    %cst_23 = arith.constant dense<0.000000e+00> : vector<1x64xf32>
    %23 = tpu.matmul %22, %21, %cst_23 {dimension_numbers = #tpu.dot_dimension_numbers<[1], [0], [0], [1], [0, 0, 1, 1], [], []>} : vector<1x4xf32>, vector<4x64xf32>, vector<1x64xf32> -> vector<1x64xf32>
    %c0_24 = arith.constant 0 : index
    %c0_25 = arith.constant 0 : index
    %24 = vector.load %arg11[%c0_24, %c0_25] : memref<1x1xf32, #tpu.memory_space<vmem>>, vector<1x1xf32>
    %25 = vector.broadcast %24 : vector<1x1xf32> to vector<1x64xf32>
    %26 = arith.addf %23, %25 : vector<1x64xf32>
    %27 = vector.extract_strided_slice %26 {offsets = [0, 0], sizes = [1, 8], strides = [1, 1]} : vector<1x64xf32> to vector<1x8xf32>
    %28 = vector.extract_strided_slice %26 {offsets = [0, 8], sizes = [1, 8], strides = [1, 1]} : vector<1x64xf32> to vector<1x8xf32>
    %29 = vector.extract_strided_slice %26 {offsets = [0, 16], sizes = [1, 8], strides = [1, 1]} : vector<1x64xf32> to vector<1x8xf32>
    %30 = vector.extract_strided_slice %26 {offsets = [0, 24], sizes = [1, 8], strides = [1, 1]} : vector<1x64xf32> to vector<1x8xf32>
    %31 = vector.extract_strided_slice %26 {offsets = [0, 32], sizes = [1, 8], strides = [1, 1]} : vector<1x64xf32> to vector<1x8xf32>
    %32 = vector.extract_strided_slice %26 {offsets = [0, 40], sizes = [1, 8], strides = [1, 1]} : vector<1x64xf32> to vector<1x8xf32>
    %33 = vector.extract_strided_slice %26 {offsets = [0, 48], sizes = [1, 8], strides = [1, 1]} : vector<1x64xf32> to vector<1x8xf32>
    %34 = vector.extract_strided_slice %26 {offsets = [0, 56], sizes = [1, 8], strides = [1, 1]} : vector<1x64xf32> to vector<1x8xf32>
    %35 = vector.shape_cast %27 : vector<1x8xf32> to vector<1x1x8xf32>
    %36 = vector.shape_cast %28 : vector<1x8xf32> to vector<1x1x8xf32>
    %37 = vector.shape_cast %29 : vector<1x8xf32> to vector<1x1x8xf32>
    %38 = vector.shape_cast %30 : vector<1x8xf32> to vector<1x1x8xf32>
    %39 = vector.shape_cast %31 : vector<1x8xf32> to vector<1x1x8xf32>
    %40 = vector.shape_cast %32 : vector<1x8xf32> to vector<1x1x8xf32>
    %41 = vector.shape_cast %33 : vector<1x8xf32> to vector<1x1x8xf32>
    %42 = vector.shape_cast %34 : vector<1x8xf32> to vector<1x1x8xf32>
    %43 = tpu.concatenate %35, %36, %37, %38, %39, %40, %41, %42 in 1 : vector<1x1x8xf32>, vector<1x1x8xf32>, vector<1x1x8xf32>, vector<1x1x8xf32>, vector<1x1x8xf32>, vector<1x1x8xf32>, vector<1x1x8xf32>, vector<1x1x8xf32> -> vector<1x8x8xf32>
    %44 = vector.shape_cast %43 : vector<1x8x8xf32> to vector<8x8xf32>
    %c0_26 = arith.constant 0 : index
    %c0_27 = arith.constant 0 : index
    %45 = vector.load %arg13[%c0_26, %c0_27] : memref<8x128xf32, #tpu.memory_space<vmem>>, vector<8x128xf32>
    %cst_28 = arith.constant dense<0.000000e+00> : vector<8x128xf32>
    %46 = tpu.matmul %44, %45, %cst_28 {dimension_numbers = #tpu.dot_dimension_numbers<[1], [0], [0], [1], [0, 0, 1, 1], [], []>} : vector<8x8xf32>, vector<8x128xf32>, vector<8x128xf32> -> vector<8x128xf32>
    %c0_29 = arith.constant 0 : index
    %c0_30 = arith.constant 0 : index
    %47 = vector.load %arg12[%c0_29, %c0_30] : memref<128x8xf32, #tpu.memory_space<vmem>>, vector<128x8xf32>
    %cst_31 = arith.constant dense<0.000000e+00> : vector<128x128xf32>
    %48 = tpu.matmul %47, %46, %cst_31 {dimension_numbers = #tpu.dot_dimension_numbers<[1], [0], [0], [1], [0, 0, 1, 1], [], []>} : vector<128x8xf32>, vector<8x128xf32>, vector<128x128xf32> -> vector<128x128xf32>
    %c0_32 = arith.constant 0 : index
    %c0_33 = arith.constant 0 : index
    %c0_34 = arith.constant 0 : index
    %c0_35 = arith.constant 0 : index
    %49 = vector.load %arg14[%c0_32, %c0_33, %c0_34, %c0_35] : memref<1x1x128x128xf32, #tpu.memory_space<vmem>>, vector<1x1x128x128xf32>
    %50 = vector.shape_cast %49 : vector<1x1x128x128xf32> to vector<128x128xf32>
    %51 = vector.shape_cast %48 : vector<128x128xf32> to vector<1x1x128x128xf32>
    tpu.vector_store %arg14[%c0_32, %c0_33, %c0_34, %c0_35], %51 {strides = array<i32>} : memref<1x1x128x128xf32, #tpu.memory_space<vmem>>, vector<1x1x128x128xf32>,
    return
  }
  func.func @transform_0(%arg0: i32) -> (i32, i32, i32) {
    %c0_i32 = arith.constant 0 : i32
    %c0_i32_0 = arith.constant 0 : i32
    %c0_i32_1 = arith.constant 0 : i32
    return %arg0, %c0_i32, %c0_i32_0 : i32, i32, i32
  }
  func.func @transform_1(%arg0: i32) -> (i32, i32) {
    %c0_i32 = arith.constant 0 : i32
    %c0_i32_0 = arith.constant 0 : i32
    %c0_i32_1 = arith.constant 0 : i32
    return %c0_i32, %c0_i32_0 : i32, i32
  }
  func.func @transform_2(%arg0: i32) -> (i32, i32) {
    %c0_i32 = arith.constant 0 : i32
    %c0_i32_0 = arith.constant 0 : i32
    %c0_i32_1 = arith.constant 0 : i32
    return %c0_i32, %c0_i32_0 : i32, i32
  }
  func.func @transform_3(%arg0: i32) -> (i32, i32) {
    %c0_i32 = arith.constant 0 : i32
    %c0_i32_0 = arith.constant 0 : i32
    %c0_i32_1 = arith.constant 0 : i32
    return %c0_i32, %c0_i32_0 : i32, i32
  }
  func.func @transform_4(%arg0: i32) -> (i32, i32) {
    %c0_i32 = arith.constant 0 : i32
    %c0_i32_0 = arith.constant 0 : i32
    %c0_i32_1 = arith.constant 0 : i32
    return %c0_i32, %c0_i32_0 : i32, i32
  }
  func.func @transform_5(%arg0: i32) -> (i32, i32) {
    %c0_i32 = arith.constant 0 : i32
    %c0_i32_0 = arith.constant 0 : i32
    %c0_i32_1 = arith.constant 0 : i32
    return %c0_i32, %c0_i32_0 : i32, i32
  }
  func.func @transform_6(%arg0: i32) -> (i32, i32) {
    %c0_i32 = arith.constant 0 : i32
    %c0_i32_0 = arith.constant 0 : i32
    %c0_i32_1 = arith.constant 0 : i32
    return %c0_i32, %c0_i32_0 : i32, i32
  }
  func.func @transform_7(%arg0: i32) -> (i32, i32) {
    %c0_i32 = arith.constant 0 : i32
    %c0_i32_0 = arith.constant 0 : i32
    %c0_i32_1 = arith.constant 0 : i32
    return %c0_i32, %c0_i32_0 : i32, i32
  }
  func.func @transform_8(%arg0: i32) -> (i32, i32) {
    %c0_i32 = arith.constant 0 : i32
    %c0_i32_0 = arith.constant 0 : i32
    %c0_i32_1 = arith.constant 0 : i32
    return %c0_i32, %c0_i32_0 : i32, i32
  }
  func.func @transform_9(%arg0: i32) -> (i32, i32) {
    %c0_i32 = arith.constant 0 : i32
    %c0_i32_0 = arith.constant 0 : i32
    %c0_i32_1 = arith.constant 0 : i32
    return %c0_i32, %c0_i32_0 : i32, i32
  }
  func.func @transform_10(%arg0: i32) -> (i32, i32) {
    %c0_i32 = arith.constant 0 : i32
    %c0_i32_0 = arith.constant 0 : i32
    %c0_i32_1 = arith.constant 0 : i32
    return %c0_i32, %c0_i32_0 : i32, i32
  }
  func.func @transform_11(%arg0: i32) -> (i32, i32) {
    %c0_i32 = arith.constant 0 : i32
    %c0_i32_0 = arith.constant 0 : i32
    %c0_i32_1 = arith.constant 0 : i32
    return %c0_i32, %c0_i32_0 : i32, i32
  }
  func.func @transform_12(%arg0: i32) -> (i32, i32) {
    %c0_i32 = arith.constant 0 : i32
    %c0_i32_0 = arith.constant 0 : i32
    %c0_i32_1 = arith.constant 0 : i32
    return %c0_i32, %c0_i32_0 : i32, i32
  }
  func.func @transform_13(%arg0: i32) -> (i32, i32, i32, i32) {
    %c0_i32 = arith.constant 0 : i32
    %c0_i32_0 = arith.constant 0 : i32
    %c0_i32_1 = arith.constant 0 : i32
    %c0_i32_2 = arith.constant 0 : i32
    return %arg0, %c0_i32, %c0_i32_0, %c0_i32_1 : i32, i32, i32, i32
  }
}

</mosaic_0001>

<llo_original>
// kernel: conv_decoder_forward.1
$region0: #{conv_decoder_forward.1}
  #allocation0 [shape = 'u32[]', space=smem, size = 0x4, offset = 0x4, fixed_abs, tag = 'smem constant byte address 0x4 - core index']
  #allocation1 [shape = 'u32[144,128]{1,0:T(1,128)}', space=vmem, size = 0x12000, scoped, tag = 'internal scratch']
  #allocation2 [shape = 'f32[1,1]{1,0:T(1,128)S(1)}', space=vmem, size = 0x200, scoped, tag = 'scoped memory for conv_decoder_forward.1']
  %s0 = inlined_call_operand.vmem [shape: f32[2,16,64], index: 0, kind: input, shape index: {}]
  %s1 = inlined_call_operand.vmem [shape: f32[8,16], index: 1, kind: input, shape index: {}]
  %s2 = inlined_call_operand.vmem [shape: f32[8,8], index: 2, kind: input, shape index: {}]
  %s3 = inlined_call_operand.vmem [shape: f32[4,8], index: 3, kind: input, shape index: {}]
  %s4 = inlined_call_operand.vmem [shape: f32[4,4], index: 4, kind: input, shape index: {}]
  %s5 = inlined_call_operand.vmem [shape: f32[1,4], index: 5, kind: input, shape index: {}]
  %s6 = inlined_call_operand.vmem [shape: f32[8,1], index: 6, kind: input, shape index: {}]
  %s7 = inlined_call_operand.vmem [shape: f32[8,1], index: 7, kind: input, shape index: {}]
  %s8 = inlined_call_operand.vmem [shape: f32[4,1], index: 8, kind: input, shape index: {}]
  %s9 = inlined_call_operand.vmem [shape: f32[4,1], index: 9, kind: input, shape index: {}]
  %s10 = inlined_call_operand.<no memory space> [shape: f32[1,1], index: 10, kind: input, shape index: {}]
  %s11 = inlined_call_operand.vmem [shape: f32[128,8], index: 11, kind: input, shape index: {}]
  %s12 = inlined_call_operand.vmem [shape: f32[8,128], index: 12, kind: input, shape index: {}]
  %s13 = inlined_call_operand.hbm [shape: f32[2,1,128,128], index: 13, kind: output, shape index: {}]
  %s14 = sld [smem:[#allocation0]]
  $region85: #{conv_decoder_forward.1} parent=0
    _
  %s16 = ssub.s32 1, %s14
  %s17 = scalar_select 0, %s16, %s14
  %v18 = vstv %s10
  %19 = vst [vmem:[#allocation2] sm:$0x1] %v18
  $region1: #{conv_decoder_forward.1} parent=0
    #allocation3 [shape = 'u8[131072]{0}', space=vmem, size = 0x20000, scoped, tag = 'output window, operand 0']
    #allocation4 [shape = 's32[2]{0}', space=sflag, size = 0x8, scoped, tag = 'scoped memory for conv_decoder_forward.1']
    %20 = vsyncpa [#allocation4], 0
    %s21 = scalar_lea.sflag [#allocation4], 1
    %22 = vsyncpa %s21, 0
    loop: start=0, step=1, limit=4
    $region2: #{conv_decoder_forward.1} parent=1 // loop_pre_header
      _
    $region3: #{conv_decoder_forward.1} parent=1 // loop_header
      %s24 = sphi 0, %s28
      %p25 = scmp.ge.s32.totalorder %s24, 4
      %s34 = sphi 0, %s36
      %s37 = sphi 0, %s34
      %s38 = sphi 0, %s37
      %s54 = sphi 0, %s38
      %s58 = sphi 0, %s58
      %s60 = sphi 0, %s58
      %s61 = sphi 0, %s60
      %s75 = sphi 0, %s61
      %s79 = sphi 0, %s79
      %s81 = sphi 0, %s79
      %s82 = sphi 0, %s81
      %s96 = sphi 0, %s82
      %s100 = sphi 0, %s100
      %s102 = sphi 0, %s100
      %s103 = sphi 0, %s102
      %s117 = sphi 0, %s103
      %s121 = sphi 0, %s121
      %s123 = sphi 0, %s121
      %s124 = sphi 0, %s123
      %s138 = sphi 0, %s124
      %s142 = sphi 0, %s142
      %s144 = sphi 0, %s142
      %s145 = sphi 0, %s144
      %s159 = sphi 0, %s145
      %s163 = sphi 0, %s163
      %s165 = sphi 0, %s163
      %s166 = sphi 0, %s165
      %s180 = sphi 0, %s166
      %s184 = sphi 0, %s184
      %s186 = sphi 0, %s184
      %s187 = sphi 0, %s186
      %s201 = sphi 0, %s187
      %s205 = sphi 0, %s205
      %s207 = sphi 0, %s205
      %s208 = sphi 0, %s207
      %s222 = sphi 0, %s208
      %s226 = sphi 0, %s226
      %s228 = sphi 0, %s226
      %s229 = sphi 0, %s228
      %s243 = sphi 0, %s229
      %s247 = sphi 0, %s247
      %s249 = sphi 0, %s247
      %s250 = sphi 0, %s249
      %s264 = sphi 0, %s250
      %s268 = sphi 0, %s268
      %s270 = sphi 0, %s268
      %s271 = sphi 0, %s270
      %s285 = sphi 0, %s271
      %s289 = sphi 0, %s289
      %s291 = sphi 0, %s289
      %s292 = sphi 0, %s291
      %s306 = sphi 0, %s292
      %s312 = sphi 0, %s314
      %s315 = sphi 0, %s312
      %s316 = sphi 0, %s315
      %s332 = sphi 0, %s316
    $region4: #{conv_decoder_forward.1} parent=1 // loop_header_branch
      %27 = sbr.rel (%p25) target = $region8
    $region5: #{conv_decoder_forward.1} parent=1 // loop_body
      %s29 = ssub.s32 %s24, 1
      %s30 = ssub.s32 %s24, 2
      %s31 = sadd.s32 %s24, 1
      %s32 = ssub.s32 %s24, %s31
      %p33 = scmp.eq.s32.totalorder %s32, 0
      %s35 = sadd.s32 %s34, 1
      %s36 = scalar_select %p33, %s34, %s35
      %p39 = pneg %p33
      %p40 = scmp.eq.s32.totalorder %s24, 1
      %p41 = por %p39, %p40
      %p42 = scmp.ne.s32.totalorder %s34, %s37
      %p43 = scmp.eq.s32.totalorder %s24, 0
      %p44 = por %p42, %p43
      %p45 = scmp.ne.s32.totalorder %s34, %s37
      %p46 = scmp.eq.s32.totalorder %s29, 1
      %p47 = por %p45, %p46
      %p48 = scmp.ne.s32.totalorder %s37, %s38
      %p49 = scmp.eq.s32.totalorder %s29, 0
      %p50 = por %p48, %p49
      %p51 = scmp.ne.s32.totalorder %s37, %s38
      %p52 = scmp.eq.s32.totalorder %s30, 1
      %p53 = por %p51, %p52
      %p55 = scmp.ne.s32.totalorder %s38, %s54
      %p56 = scmp.eq.s32.totalorder %s30, 0
      %p57 = por %p55, %p56
      %s59 = sadd.s32 %s58, 1
      %p62 = scmp.eq.s32.totalorder %s24, 1
      %p63 = scmp.ne.s32.totalorder %s58, %s60
      %p64 = scmp.eq.s32.totalorder %s24, 0
      %p65 = por %p63, %p64
      %p66 = scmp.ne.s32.totalorder %s58, %s60
      %p67 = scmp.eq.s32.totalorder %s29, 1
      %p68 = por %p66, %p67
      %p69 = scmp.ne.s32.totalorder %s60, %s61
      %p70 = scmp.eq.s32.totalorder %s29, 0
      %p71 = por %p69, %p70
      %p72 = scmp.ne.s32.totalorder %s60, %s61
      %p73 = scmp.eq.s32.totalorder %s30, 1
      %p74 = por %p72, %p73
      %p76 = scmp.ne.s32.totalorder %s61, %s75
      %p77 = scmp.eq.s32.totalorder %s30, 0
      %p78 = por %p76, %p77
      %s80 = sadd.s32 %s79, 1
      %p83 = scmp.eq.s32.totalorder %s24, 1
      %p84 = scmp.ne.s32.totalorder %s79, %s81
      %p85 = scmp.eq.s32.totalorder %s24, 0
      %p86 = por %p84, %p85
      %p87 = scmp.ne.s32.totalorder %s79, %s81
      %p88 = scmp.eq.s32.totalorder %s29, 1
      %p89 = por %p87, %p88
      %p90 = scmp.ne.s32.totalorder %s81, %s82
      %p91 = scmp.eq.s32.totalorder %s29, 0
      %p92 = por %p90, %p91
      %p93 = scmp.ne.s32.totalorder %s81, %s82
      %p94 = scmp.eq.s32.totalorder %s30, 1
      %p95 = por %p93, %p94
      %p97 = scmp.ne.s32.totalorder %s82, %s96
      %p98 = scmp.eq.s32.totalorder %s30, 0
      %p99 = por %p97, %p98
      %s101 = sadd.s32 %s100, 1
      %p104 = scmp.eq.s32.totalorder %s24, 1
      %p105 = scmp.ne.s32.totalorder %s100, %s102
      %p106 = scmp.eq.s32.totalorder %s24, 0
      %p107 = por %p105, %p106
      %p108 = scmp.ne.s32.totalorder %s100, %s102
      %p109 = scmp.eq.s32.totalorder %s29, 1
      %p110 = por %p108, %p109
      %p111 = scmp.ne.s32.totalorder %s102, %s103
      %p112 = scmp.eq.s32.totalorder %s29, 0
      %p113 = por %p111, %p112
      %p114 = scmp.ne.s32.totalorder %s102, %s103
      %p115 = scmp.eq.s32.totalorder %s30, 1
      %p116 = por %p114, %p115
      %p118 = scmp.ne.s32.totalorder %s103, %s117
      %p119 = scmp.eq.s32.totalorder %s30, 0
      %p120 = por %p118, %p119
      %s122 = sadd.s32 %s121, 1
      %p125 = scmp.eq.s32.totalorder %s24, 1
      %p126 = scmp.ne.s32.totalorder %s121, %s123
      %p127 = scmp.eq.s32.totalorder %s24, 0
      %p128 = por %p126, %p127
      %p129 = scmp.ne.s32.totalorder %s121, %s123
      %p130 = scmp.eq.s32.totalorder %s29, 1
      %p131 = por %p129, %p130
      %p132 = scmp.ne.s32.totalorder %s123, %s124
      %p133 = scmp.eq.s32.totalorder %s29, 0
      %p134 = por %p132, %p133
      %p135 = scmp.ne.s32.totalorder %s123, %s124
      %p136 = scmp.eq.s32.totalorder %s30, 1
      %p137 = por %p135, %p136
      %p139 = scmp.ne.s32.totalorder %s124, %s138
      %p140 = scmp.eq.s32.totalorder %s30, 0
      %p141 = por %p139, %p140
      %s143 = sadd.s32 %s142, 1
      %p146 = scmp.eq.s32.totalorder %s24, 1
      %p147 = scmp.ne.s32.totalorder %s142, %s144
      %p148 = scmp.eq.s32.totalorder %s24, 0
      %p149 = por %p147, %p148
      %p150 = scmp.ne.s32.totalorder %s142, %s144
      %p151 = scmp.eq.s32.totalorder %s29, 1
      %p152 = por %p150, %p151
      %p153 = scmp.ne.s32.totalorder %s144, %s145
      %p154 = scmp.eq.s32.totalorder %s29, 0
      %p155 = por %p153, %p154
      %p156 = scmp.ne.s32.totalorder %s144, %s145
      %p157 = scmp.eq.s32.totalorder %s30, 1
      %p158 = por %p156, %p157
      %p160 = scmp.ne.s32.totalorder %s145, %s159
      %p161 = scmp.eq.s32.totalorder %s30, 0
      %p162 = por %p160, %p161
      %s164 = sadd.s32 %s163, 1
      %p167 = scmp.eq.s32.totalorder %s24, 1
      %p168 = scmp.ne.s32.totalorder %s163, %s165
      %p169 = scmp.eq.s32.totalorder %s24, 0
      %p170 = por %p168, %p169
      %p171 = scmp.ne.s32.totalorder %s163, %s165
      %p172 = scmp.eq.s32.totalorder %s29, 1
      %p173 = por %p171, %p172
      %p174 = scmp.ne.s32.totalorder %s165, %s166
      %p175 = scmp.eq.s32.totalorder %s29, 0
      %p176 = por %p174, %p175
      %p177 = scmp.ne.s32.totalorder %s165, %s166
      %p178 = scmp.eq.s32.totalorder %s30, 1
      %p179 = por %p177, %p178
      %p181 = scmp.ne.s32.totalorder %s166, %s180
      %p182 = scmp.eq.s32.totalorder %s30, 0
      %p183 = por %p181, %p182
      %s185 = sadd.s32 %s184, 1
      %p188 = scmp.eq.s32.totalorder %s24, 1
      %p189 = scmp.ne.s32.totalorder %s184, %s186
      %p190 = scmp.eq.s32.totalorder %s24, 0
      %p191 = por %p189, %p190
      %p192 = scmp.ne.s32.totalorder %s184, %s186
      %p193 = scmp.eq.s32.totalorder %s29, 1
      %p194 = por %p192, %p193
      %p195 = scmp.ne.s32.totalorder %s186, %s187
      %p196 = scmp.eq.s32.totalorder %s29, 0
      %p197 = por %p195, %p196
      %p198 = scmp.ne.s32.totalorder %s186, %s187
      %p199 = scmp.eq.s32.totalorder %s30, 1
      %p200 = por %p198, %p199
      %p202 = scmp.ne.s32.totalorder %s187, %s201
      %p203 = scmp.eq.s32.totalorder %s30, 0
      %p204 = por %p202, %p203
      %s206 = sadd.s32 %s205, 1
      %p209 = scmp.eq.s32.totalorder %s24, 1
      %p210 = scmp.ne.s32.totalorder %s205, %s207
      %p211 = scmp.eq.s32.totalorder %s24, 0
      %p212 = por %p210, %p211
      %p213 = scmp.ne.s32.totalorder %s205, %s207
      %p214 = scmp.eq.s32.totalorder %s29, 1
      %p215 = por %p213, %p214
      %p216 = scmp.ne.s32.totalorder %s207, %s208
      %p217 = scmp.eq.s32.totalorder %s29, 0
      %p218 = por %p216, %p217
      %p219 = scmp.ne.s32.totalorder %s207, %s208
      %p220 = scmp.eq.s32.totalorder %s30, 1
      %p221 = por %p219, %p220
      %p223 = scmp.ne.s32.totalorder %s208, %s222
      %p224 = scmp.eq.s32.totalorder %s30, 0
      %p225 = por %p223, %p224
      %s227 = sadd.s32 %s226, 1
      %p230 = scmp.eq.s32.totalorder %s24, 1
      %p231 = scmp.ne.s32.totalorder %s226, %s228
      %p232 = scmp.eq.s32.totalorder %s24, 0
      %p233 = por %p231, %p232
      %p234 = scmp.ne.s32.totalorder %s226, %s228
      %p235 = scmp.eq.s32.totalorder %s29, 1
      %p236 = por %p234, %p235
      %p237 = scmp.ne.s32.totalorder %s228, %s229
      %p238 = scmp.eq.s32.totalorder %s29, 0
      %p239 = por %p237, %p238
      %p240 = scmp.ne.s32.totalorder %s228, %s229
      %p241 = scmp.eq.s32.totalorder %s30, 1
      %p242 = por %p240, %p241
      %p244 = scmp.ne.s32.totalorder %s229, %s243
      %p245 = scmp.eq.s32.totalorder %s30, 0
      %p246 = por %p244, %p245
      %s248 = sadd.s32 %s247, 1
      %p251 = scmp.eq.s32.totalorder %s24, 1
      %p252 = scmp.ne.s32.totalorder %s247, %s249
      %p253 = scmp.eq.s32.totalorder %s24, 0
      %p254 = por %p252, %p253
      %p255 = scmp.ne.s32.totalorder %s247, %s249
      %p256 = scmp.eq.s32.totalorder %s29, 1
      %p257 = por %p255, %p256
      %p258 = scmp.ne.s32.totalorder %s249, %s250
      %p259 = scmp.eq.s32.totalorder %s29, 0
      %p260 = por %p258, %p259
      %p261 = scmp.ne.s32.totalorder %s249, %s250
      %p262 = scmp.eq.s32.totalorder %s30, 1
      %p263 = por %p261, %p262
      %p265 = scmp.ne.s32.totalorder %s250, %s264
      %p266 = scmp.eq.s32.totalorder %s30, 0
      %p267 = por %p265, %p266
      %s269 = sadd.s32 %s268, 1
      %p272 = scmp.eq.s32.totalorder %s24, 1
      %p273 = scmp.ne.s32.totalorder %s268, %s270
      %p274 = scmp.eq.s32.totalorder %s24, 0
      %p275 = por %p273, %p274
      %p276 = scmp.ne.s32.totalorder %s268, %s270
      %p277 = scmp.eq.s32.totalorder %s29, 1
      %p278 = por %p276, %p277
      %p279 = scmp.ne.s32.totalorder %s270, %s271
      %p280 = scmp.eq.s32.totalorder %s29, 0
      %p281 = por %p279, %p280
      %p282 = scmp.ne.s32.totalorder %s270, %s271
      %p283 = scmp.eq.s32.totalorder %s30, 1
      %p284 = por %p282, %p283
      %p286 = scmp.ne.s32.totalorder %s271, %s285
      %p287 = scmp.eq.s32.totalorder %s30, 0
      %p288 = por %p286, %p287
      %s290 = sadd.s32 %s289, 1
      %p293 = scmp.eq.s32.totalorder %s24, 1
      %p294 = scmp.ne.s32.totalorder %s289, %s291
      %p295 = scmp.eq.s32.totalorder %s24, 0
      %p296 = por %p294, %p295
      %p297 = scmp.ne.s32.totalorder %s289, %s291
      %p298 = scmp.eq.s32.totalorder %s29, 1
      %p299 = por %p297, %p298
      %p300 = scmp.ne.s32.totalorder %s291, %s292
      %p301 = scmp.eq.s32.totalorder %s29, 0
      %p302 = por %p300, %p301
      %p303 = scmp.ne.s32.totalorder %s291, %s292
      %p304 = scmp.eq.s32.totalorder %s30, 1
      %p305 = por %p303, %p304
      %p307 = scmp.ne.s32.totalorder %s292, %s306
      %p308 = scmp.eq.s32.totalorder %s30, 0
      %p309 = por %p307, %p308
      %s310 = ssub.s32 %s24, %s31
      %p311 = scmp.eq.s32.totalorder %s310, 0
      %s313 = sadd.s32 %s312, 1
      %s314 = scalar_select %p311, %s312, %s313
      %p317 = pneg %p311
      %p318 = scmp.eq.s32.totalorder %s24, 1
      %p319 = por %p317, %p318
      %p320 = scmp.ne.s32.totalorder %s312, %s315
      %p321 = scmp.eq.s32.totalorder %s24, 0
      %p322 = por %p320, %p321
      %p323 = scmp.ne.s32.totalorder %s312, %s315
      %p324 = scmp.eq.s32.totalorder %s29, 1
      %p325 = por %p323, %p324
      %p326 = scmp.ne.s32.totalorder %s315, %s316
      %p327 = scmp.eq.s32.totalorder %s29, 0
      %p328 = por %p326, %p327
      %p329 = scmp.ne.s32.totalorder %s315, %s316
      %p330 = scmp.eq.s32.totalorder %s30, 1
      %p331 = por %p329, %p330
      %p333 = scmp.ne.s32.totalorder %s316, %s332
      %p334 = scmp.eq.s32.totalorder %s30, 0
      %p335 = por %p333, %p334
      %p336 = scmp.le.s32.totalorder 1, %s24
      %p337 = scmp.lt.s32.totalorder %s24, 3
      %p338 = pnand %p336, %p337
      %p339 = pneg %p338
      // Predicated region
      $region9: #{conv_decoder_forward.1} parent=5 // pred_check
        _
      $region10: #{conv_decoder_forward.1} parent=5 // pred_check_branch
        %341 = sbr.rel (%p338) target = $region12
      $region11: #{conv_decoder_forward.1} parent=5 // pred_region
        %s342 = ssub.s32 %s24, 1
        // Predicated region
        $region13: #{conv_decoder_forward.1} parent=11 // pred_check
          %p343 = pneg %p71
        $region14: #{conv_decoder_forward.1} parent=11 // pred_check_branch
          %345 = sbr.rel (%p343) target = $region16
        $region15: #{conv_decoder_forward.1} parent=11 // pred_region
          _
        $region16: #{conv_decoder_forward.1} parent=11 // pred_fallthru
          _
        // Predicated region
        $region17: #{conv_decoder_forward.1} parent=11 // pred_check
          %p346 = pneg %p92
        $region18: #{conv_decoder_forward.1} parent=11 // pred_check_branch
          %348 = sbr.rel (%p346) target = $region20
        $region19: #{conv_decoder_forward.1} parent=11 // pred_region
          _
        $region20: #{conv_decoder_forward.1} parent=11 // pred_fallthru
          _
        // Predicated region
        $region21: #{conv_decoder_forward.1} parent=11 // pred_check
          %p349 = pneg %p113
        $region22: #{conv_decoder_forward.1} parent=11 // pred_check_branch
          %351 = sbr.rel (%p349) target = $region24
        $region23: #{conv_decoder_forward.1} parent=11 // pred_region
          _
        $region24: #{conv_decoder_forward.1} parent=11 // pred_fallthru
          _
        // Predicated region
        $region25: #{conv_decoder_forward.1} parent=11 // pred_check
          %p352 = pneg %p134
        $region26: #{conv_decoder_forward.1} parent=11 // pred_check_branch
          %354 = sbr.rel (%p352) target = $region28
        $region27: #{conv_decoder_forward.1} parent=11 // pred_region
          _
        $region28: #{conv_decoder_forward.1} parent=11 // pred_fallthru
          _
        // Predicated region
        $region29: #{conv_decoder_forward.1} parent=11 // pred_check
          %p355 = pneg %p155
        $region30: #{conv_decoder_forward.1} parent=11 // pred_check_branch
          %357 = sbr.rel (%p355) target = $region32
        $region31: #{conv_decoder_forward.1} parent=11 // pred_region
          _
        $region32: #{conv_decoder_forward.1} parent=11 // pred_fallthru
          _
        // Predicated region
        $region33: #{conv_decoder_forward.1} parent=11 // pred_check
          %p358 = pneg %p176
        $region34: #{conv_decoder_forward.1} parent=11 // pred_check_branch
          %360 = sbr.rel (%p358) target = $region36
        $region35: #{conv_decoder_forward.1} parent=11 // pred_region
          _
        $region36: #{conv_decoder_forward.1} parent=11 // pred_fallthru
          _
        // Predicated region
        $region37: #{conv_decoder_forward.1} parent=11 // pred_check
          %p361 = pneg %p197
        $region38: #{conv_decoder_forward.1} parent=11 // pred_check_branch
          %363 = sbr.rel (%p361) target = $region40
        $region39: #{conv_decoder_forward.1} parent=11 // pred_region
          _
        $region40: #{conv_decoder_forward.1} parent=11 // pred_fallthru
          _
        // Predicated region
        $region41: #{conv_decoder_forward.1} parent=11 // pred_check
          %p364 = pneg %p218
        $region42: #{conv_decoder_forward.1} parent=11 // pred_check_branch
          %366 = sbr.rel (%p364) target = $region44
        $region43: #{conv_decoder_forward.1} parent=11 // pred_region
          _
        $region44: #{conv_decoder_forward.1} parent=11 // pred_fallthru
          _
        // Predicated region
        $region45: #{conv_decoder_forward.1} parent=11 // pred_check
          %p367 = pneg %p239
        $region46: #{conv_decoder_forward.1} parent=11 // pred_check_branch
          %369 = sbr.rel (%p367) target = $region48
        $region47: #{conv_decoder_forward.1} parent=11 // pred_region
          _
        $region48: #{conv_decoder_forward.1} parent=11 // pred_fallthru
          _
        // Predicated region
        $region49: #{conv_decoder_forward.1} parent=11 // pred_check
          %p370 = pneg %p260
        $region50: #{conv_decoder_forward.1} parent=11 // pred_check_branch
          %372 = sbr.rel (%p370) target = $region52
        $region51: #{conv_decoder_forward.1} parent=11 // pred_region
          _
        $region52: #{conv_decoder_forward.1} parent=11 // pred_fallthru
          _
        // Predicated region
        $region53: #{conv_decoder_forward.1} parent=11 // pred_check
          %p373 = pneg %p281
        $region54: #{conv_decoder_forward.1} parent=11 // pred_check_branch
          %375 = sbr.rel (%p373) target = $region56
        $region55: #{conv_decoder_forward.1} parent=11 // pred_region
          _
        $region56: #{conv_decoder_forward.1} parent=11 // pred_fallthru
          _
        // Predicated region
        $region57: #{conv_decoder_forward.1} parent=11 // pred_check
          %p376 = pneg %p302
        $region58: #{conv_decoder_forward.1} parent=11 // pred_check_branch
          %378 = sbr.rel (%p376) target = $region60
        $region59: #{conv_decoder_forward.1} parent=11 // pred_region
          _
        $region60: #{conv_decoder_forward.1} parent=11 // pred_fallthru
          _
      $region12: #{conv_decoder_forward.1} parent=5 // pred_fallthru
        _
      %p379 = scmp.lt.s32.totalorder %s24, 2
      // Predicated region
      $region61: #{conv_decoder_forward.1} parent=5 // pred_check
        %p380 = pneg %p379
      $region62: #{conv_decoder_forward.1} parent=5 // pred_check_branch
        %382 = sbr.rel (%p380) target = $region64
      $region63: #{conv_decoder_forward.1} parent=5 // pred_region
        // Predicated region
        $region65: #{conv_decoder_forward.1} parent=63 // pred_check
          %p383 = pneg %p44
        $region66: #{conv_decoder_forward.1} parent=63 // pred_check_branch
          %385 = sbr.rel (%p383) target = $region68
        $region67: #{conv_decoder_forward.1} parent=63 // pred_region
          %p386 = scmp.lt.s32.totalorder %s24, 1
          %s387 = scalar_select %p386, %s24, 1
          %s388 = smul.addr %s387, 2
          %s389 = smul.addr %s388, 8
          %s390 = scalar_lea.vmem %s0, %s389
        $region68: #{conv_decoder_forward.1} parent=63 // pred_fallthru
          _
      $region64: #{conv_decoder_forward.1} parent=5 // pred_fallthru
        _
      %p391 = scmp.le.s32.totalorder 1, %s24
      %p392 = scmp.lt.s32.totalorder %s24, 3
      %p393 = pnand %p391, %p392
      %p394 = pneg %p393
      // Predicated region
      $region69: #{conv_decoder_forward.1} parent=5 // pred_check
        _
      $region70: #{conv_decoder_forward.1} parent=5 // pred_check_branch
        %396 = sbr.rel (%p393) target = $region72
      $region71: #{conv_decoder_forward.1} parent=5 // pred_region
        %s397 = ssub.s32 %s24, 1
        %p398 = scmp.lt.s32.totalorder %s29, 1
        %s399 = scalar_select %p398, %s29, 1
        %s400 = smul.addr %s399, 2
        %s401 = smul.addr %s400, 8
        %s402 = scalar_lea.vmem %s0, %s401
        %p403 = pneg %p50
        %p404 = pneg %p47
        %p405 = pneg %p71
        %p406 = pneg %p68
        %p407 = pneg %p92
        %p408 = pneg %p89
        %p409 = pneg %p113
        %p410 = pneg %p110
        %p411 = pneg %p134
        %p412 = pneg %p131
        %p413 = pneg %p155
        %p414 = pneg %p152
        %p415 = pneg %p176
        %p416 = pneg %p173
        %p417 = pneg %p197
        %p418 = pneg %p194
        %p419 = pneg %p218
        %p420 = pneg %p215
        %p421 = pneg %p239
        %p422 = pneg %p236
        %p423 = pneg %p260
        %p424 = pneg %p257
        %p425 = pneg %p281
        %p426 = pneg %p278
        %p427 = pneg %p302
        %p428 = pneg %p299
        %p429 = pneg %p328
        %p430 = pneg %p325
        %s431 = sand.u32 %s315, 1
        %s432 = scalar_lea.sflag [#allocation4], %s431
        %s433 = sand.u32 %s315, 1
        %s434 = smul.addr %s433, 128
        %s435 = scalar_lea.vmem [#allocation3], %s434
        %p436 = scmp.lt.s32.totalorder %s29, 1
        %s437 = scalar_select %p436, %s29, 1
        %s438 = smul.addr %s437, 2
        %s439 = smul.addr %s438, 8
        %s440 = scalar_lea.vmem %s0, %s439
        %v441 = vld [vmem:[%s440] sm:$0xff]
        %v442 = vld [vmem:[%s440 + $0x8] sm:$0xff]
        %v443 = vld [vmem:[%s1] sm:$0xff]
        %v444 = vld [vmem:[%s6] sm:$0xff]
        %446 = vset.pattern.permute.xlu0 0
        %447 = vperm.xlu0 %446, %v444
        %v448 = vpop.permute.xlu0 %447
        %vm450 = vcmask 130048
        %v452 = vsel %vm450, %v443, 0
        %454 = vmatprep.subr.mxu0 0.0
        %455 = vmatpush1.msra.mxu0 0.0
        %456 = vmatprep.subr.mxu0 0.0
        %457 = vmatpush1.msra.mxu0 0.0
        %458 = vmatprep.subr.mxu0 0.0
        %459 = vmatpush1.msra.mxu0 0.0
        %460 = vmatprep.subr.mxu0 0.0
        %461 = vmatpush1.msra.mxu0 0.0
        %462 = vmatprep.subr.mxu0 0.0
        %463 = vmatpush1.msra.mxu0 0.0
        %464 = vmatprep.subr.mxu0 0.0
        %465 = vmatpush1.msra.mxu0 0.0
        %466 = vmatprep.subr.mxu0 0.0
        %467 = vmatpush1.msra.mxu0 0.0
        %468 = vmatprep.subr.mxu0 0.0
        %469 = vmatpush1.msra.mxu0 0.0
        %470 = vmatprep.subr.mxu0 0.0
        %471 = vmatpush1.msra.mxu0 0.0
        %472 = vmatprep.subr.mxu0 0.0
        %473 = vmatpush1.msra.mxu0 0.0
        %474 = vmatprep.subr.mxu0 0.0
        %475 = vmatpush1.msra.mxu0 0.0
        %476 = vmatprep.subr.mxu0 0.0
        %477 = vmatpush1.msra.mxu0 0.0
        %478 = vmatprep.subr.mxu0 0.0
        %479 = vmatpush1.msra.mxu0 0.0
        %480 = vmatprep.subr.mxu0 0.0
        %481 = vmatpush1.msra.mxu0 0.0
        %482 = vmatprep.subr.mxu0 0.0
        %483 = vmatpush1.msra.mxu0 %v442
        %484 = vmatprep.subr.mxu0 0.0
        %485 = vmatpush1.msra.mxu0 %v441
        %486 = vmatprep.subr.mxu0 0.0
        %487 = vmatpush2.msra.mxu0 0.0
        %488 = vmatprep.subr.mxu0 0.0
        %489 = vmatpush2.msra.mxu0 0.0
        %490 = vmatprep.subr.mxu0 0.0
        %491 = vmatpush2.msra.mxu0 0.0
        %492 = vmatprep.subr.mxu0 0.0
        %493 = vmatpush2.msra.mxu0 0.0
        %494 = vmatprep.subr.mxu0 0.0
        %495 = vmatpush2.msra.mxu0 0.0
        %496 = vmatprep.subr.mxu0 0.0
        %497 = vmatpush2.msra.mxu0 0.0
        %498 = vmatprep.subr.mxu0 0.0
        %499 = vmatpush2.msra.mxu0 0.0
        %500 = vmatprep.subr.mxu0 0.0
        %501 = vmatpush2.msra.mxu0 0.0
        %502 = vmatprep.subr.mxu0 0.0
        %503 = vmatpush2.msra.mxu0 0.0
        %504 = vmatprep.subr.mxu0 0.0
        %505 = vmatpush2.msra.mxu0 0.0
        %506 = vmatprep.subr.mxu0 0.0
        %507 = vmatpush2.msra.mxu0 0.0
        %508 = vmatprep.subr.mxu0 0.0
        %509 = vmatpush2.msra.mxu0 0.0
        %510 = vmatprep.subr.mxu0 0.0
        %511 = vmatpush2.msra.mxu0 0.0
        %512 = vmatprep.subr.mxu0 0.0
        %513 = vmatpush2.msra.mxu0 0.0
        %514 = vmatprep.subr.mxu0 0.0
        %515 = vmatpush2.msra.mxu0 0.0
        %516 = vmatprep.subr.mxu0 0.0
        %517 = vmatpush2.msra.mxu0 0.0
        %518 = vmatprep.mubr.f32.mxu0 0.0
        %519 = vmatmul.mubr.f32.gmra.mxu0 %v452
        %v520 = vpop.f32.mrf.mxu0
        %v521 = vadd.f32 %v448, %v520
        %v522 = vpop.f32.mrf.mxu0
        %523 = vdwg.mxu0
        %v524 = vld [vmem:[%s2] sm:$0xff]
        %v525 = vld [vmem:[%s7] sm:$0xff]
        %527 = vset.pattern.permute.xlu0 0
        %528 = vperm.xlu0 %527, %v525
        %v529 = vpop.permute.xlu0 %528
        %vm531 = vcmask 64512
        %v533 = vsel %vm531, %v524, 0
        %535 = vmatprep.subr.mxu0 0.0
        %536 = vmatpush1.msra.mxu0 0.0
        %537 = vmatprep.subr.mxu0 0.0
        %538 = vmatpush1.msra.mxu0 0.0
        %539 = vmatprep.subr.mxu0 0.0
        %540 = vmatpush1.msra.mxu0 0.0
        %541 = vmatprep.subr.mxu0 0.0
        %542 = vmatpush1.msra.mxu0 0.0
        %543 = vmatprep.subr.mxu0 0.0
        %544 = vmatpush1.msra.mxu0 0.0
        %545 = vmatprep.subr.mxu0 0.0
        %546 = vmatpush1.msra.mxu0 0.0
        %547 = vmatprep.subr.mxu0 0.0
        %548 = vmatpush1.msra.mxu0 0.0
        %549 = vmatprep.subr.mxu0 0.0
        %550 = vmatpush1.msra.mxu0 0.0
        %551 = vmatprep.subr.mxu0 0.0
        %552 = vmatpush1.msra.mxu0 0.0
        %553 = vmatprep.subr.mxu0 0.0
        %554 = vmatpush1.msra.mxu0 0.0
        %555 = vmatprep.subr.mxu0 0.0
        %556 = vmatpush1.msra.mxu0 0.0
        %557 = vmatprep.subr.mxu0 0.0
        %558 = vmatpush1.msra.mxu0 0.0
        %559 = vmatprep.subr.mxu0 0.0
        %560 = vmatpush1.msra.mxu0 0.0
        %561 = vmatprep.subr.mxu0 0.0
        %562 = vmatpush1.msra.mxu0 0.0
        %563 = vmatprep.subr.mxu0 0.0
        %564 = vmatpush1.msra.mxu0 0.0
        %565 = vmatprep.subr.mxu0 0.0
        %566 = vmatpush1.msra.mxu0 %v521
        %567 = vmatprep.subr.mxu0 0.0
        %568 = vmatpush2.msra.mxu0 0.0
        %569 = vmatprep.subr.mxu0 0.0
        %570 = vmatpush2.msra.mxu0 0.0
        %571 = vmatprep.subr.mxu0 0.0
        %572 = vmatpush2.msra.mxu0 0.0
        %573 = vmatprep.subr.mxu0 0.0
        %574 = vmatpush2.msra.mxu0 0.0
        %575 = vmatprep.subr.mxu0 0.0
        %576 = vmatpush2.msra.mxu0 0.0
        %577 = vmatprep.subr.mxu0 0.0
        %578 = vmatpush2.msra.mxu0 0.0
        %579 = vmatprep.subr.mxu0 0.0
        %580 = vmatpush2.msra.mxu0 0.0
        %581 = vmatprep.subr.mxu0 0.0
        %582 = vmatpush2.msra.mxu0 0.0
        %583 = vmatprep.subr.mxu0 0.0
        %584 = vmatpush2.msra.mxu0 0.0
        %585 = vmatprep.subr.mxu0 0.0
        %586 = vmatpush2.msra.mxu0 0.0
        %587 = vmatprep.subr.mxu0 0.0
        %588 = vmatpush2.msra.mxu0 0.0
        %589 = vmatprep.subr.mxu0 0.0
        %590 = vmatpush2.msra.mxu0 0.0
        %591 = vmatprep.subr.mxu0 0.0
        %592 = vmatpush2.msra.mxu0 0.0
        %593 = vmatprep.subr.mxu0 0.0
        %594 = vmatpush2.msra.mxu0 0.0
        %595 = vmatprep.subr.mxu0 0.0
        %596 = vmatpush2.msra.mxu0 0.0
        %597 = vmatprep.subr.mxu0 0.0
        %598 = vmatpush2.msra.mxu0 0.0
        %599 = vmatprep.mubr.f32.mxu0 0.0
        %600 = vmatmul.mubr.f32.gmra.mxu0 %v533
        %v601 = vpop.f32.mrf.mxu0
        %v602 = vadd.f32 %v529, %v601
        %v603 = vpop.f32.mrf.mxu0
        %604 = vdwg.mxu0
        %v605 = vld [vmem:[%s3] sm:$0xf]
        %v606 = vld [vmem:[%s8] sm:$0xf]
        %608 = vset.pattern.permute.xlu0 0
        %609 = vperm.xlu0 %608, %v606
        %v610 = vpop.permute.xlu0 %609
        %v613 = vsel %vm531, %v605, 0
        %615 = vmatprep.subr.mxu0 0.0
        %616 = vmatpush1.msra.mxu0 0.0
        %617 = vmatprep.subr.mxu0 0.0
        %618 = vmatpush1.msra.mxu0 0.0
        %619 = vmatprep.subr.mxu0 0.0
        %620 = vmatpush1.msra.mxu0 0.0
        %621 = vmatprep.subr.mxu0 0.0
        %622 = vmatpush1.msra.mxu0 0.0
        %623 = vmatprep.subr.mxu0 0.0
        %624 = vmatpush1.msra.mxu0 0.0
        %625 = vmatprep.subr.mxu0 0.0
        %626 = vmatpush1.msra.mxu0 0.0
        %627 = vmatprep.subr.mxu0 0.0
        %628 = vmatpush1.msra.mxu0 0.0
        %629 = vmatprep.subr.mxu0 0.0
        %630 = vmatpush1.msra.mxu0 0.0
        %631 = vmatprep.subr.mxu0 0.0
        %632 = vmatpush1.msra.mxu0 0.0
        %633 = vmatprep.subr.mxu0 0.0
        %634 = vmatpush1.msra.mxu0 0.0
        %635 = vmatprep.subr.mxu0 0.0
        %636 = vmatpush1.msra.mxu0 0.0
        %637 = vmatprep.subr.mxu0 0.0
        %638 = vmatpush1.msra.mxu0 0.0
        %639 = vmatprep.subr.mxu0 0.0
        %640 = vmatpush1.msra.mxu0 0.0
        %641 = vmatprep.subr.mxu0 0.0
        %642 = vmatpush1.msra.mxu0 0.0
        %643 = vmatprep.subr.mxu0 0.0
        %644 = vmatpush1.msra.mxu0 0.0
        %645 = vmatprep.subr.mxu0 0.0
        %646 = vmatpush1.msra.mxu0 %v602
        %647 = vmatprep.subr.mxu0 0.0
        %648 = vmatpush2.msra.mxu0 0.0
        %649 = vmatprep.subr.mxu0 0.0
        %650 = vmatpush2.msra.mxu0 0.0
        %651 = vmatprep.subr.mxu0 0.0
        %652 = vmatpush2.msra.mxu0 0.0
        %653 = vmatprep.subr.mxu0 0.0
        %654 = vmatpush2.msra.mxu0 0.0
        %655 = vmatprep.subr.mxu0 0.0
        %656 = vmatpush2.msra.mxu0 0.0
        %657 = vmatprep.subr.mxu0 0.0
        %658 = vmatpush2.msra.mxu0 0.0
        %659 = vmatprep.subr.mxu0 0.0
        %660 = vmatpush2.msra.mxu0 0.0
        %661 = vmatprep.subr.mxu0 0.0
        %662 = vmatpush2.msra.mxu0 0.0
        %663 = vmatprep.subr.mxu0 0.0
        %664 = vmatpush2.msra.mxu0 0.0
        %665 = vmatprep.subr.mxu0 0.0
        %666 = vmatpush2.msra.mxu0 0.0
        %667 = vmatprep.subr.mxu0 0.0
        %668 = vmatpush2.msra.mxu0 0.0
        %669 = vmatprep.subr.mxu0 0.0
        %670 = vmatpush2.msra.mxu0 0.0
        %671 = vmatprep.subr.mxu0 0.0
        %672 = vmatpush2.msra.mxu0 0.0
        %673 = vmatprep.subr.mxu0 0.0
        %674 = vmatpush2.msra.mxu0 0.0
        %675 = vmatprep.subr.mxu0 0.0
        %676 = vmatpush2.msra.mxu0 0.0
        %677 = vmatprep.subr.mxu0 0.0
        %678 = vmatpush2.msra.mxu0 0.0
        %679 = vmatprep.mubr.f32.mxu0 0.0
        %680 = vmatmul.mubr.f32.gmra.mxu0 %v613
        %v681 = vpop.f32.mrf.mxu0
        %v682 = vadd.f32 %v610, %v681
        %v683 = vpop.f32.mrf.mxu0
        %684 = vdwg.mxu0
        %v685 = vld [vmem:[%s4] sm:$0xf]
        %v686 = vld [vmem:[%s9] sm:$0xf]
        %688 = vset.pattern.permute.xlu0 0
        %689 = vperm.xlu0 %688, %v686
        %v690 = vpop.permute.xlu0 %689
        %vm692 = vcmask 31744
        %v694 = vsel %vm692, %v685, 0
        %vm696 = vcmask 1043456
        %v698 = vsel %vm696, %v682, 0
        %700 = vmatprep.subr.mxu0 0.0
        %701 = vmatpush1.msra.mxu0 0.0
        %702 = vmatprep.subr.mxu0 0.0
        %703 = vmatpush1.msra.mxu0 0.0
        %704 = vmatprep.subr.mxu0 0.0
        %705 = vmatpush1.msra.mxu0 0.0
        %706 = vmatprep.subr.mxu0 0.0
        %707 = vmatpush1.msra.mxu0 0.0
        %708 = vmatprep.subr.mxu0 0.0
        %709 = vmatpush1.msra.mxu0 0.0
        %710 = vmatprep.subr.mxu0 0.0
        %711 = vmatpush1.msra.mxu0 0.0
        %712 = vmatprep.subr.mxu0 0.0
        %713 = vmatpush1.msra.mxu0 0.0
        %714 = vmatprep.subr.mxu0 0.0
        %715 = vmatpush1.msra.mxu0 0.0
        %716 = vmatprep.subr.mxu0 0.0
        %717 = vmatpush1.msra.mxu0 0.0
        %718 = vmatprep.subr.mxu0 0.0
        %719 = vmatpush1.msra.mxu0 0.0
        %720 = vmatprep.subr.mxu0 0.0
        %721 = vmatpush1.msra.mxu0 0.0
        %722 = vmatprep.subr.mxu0 0.0
        %723 = vmatpush1.msra.mxu0 0.0
        %724 = vmatprep.subr.mxu0 0.0
        %725 = vmatpush1.msra.mxu0 0.0
        %726 = vmatprep.subr.mxu0 0.0
        %727 = vmatpush1.msra.mxu0 0.0
        %728 = vmatprep.subr.mxu0 0.0
        %729 = vmatpush1.msra.mxu0 0.0
        %730 = vmatprep.subr.mxu0 0.0
        %731 = vmatpush1.msra.mxu0 %v698
        %732 = vmatprep.subr.mxu0 0.0
        %733 = vmatpush2.msra.mxu0 0.0
        %734 = vmatprep.subr.mxu0 0.0
        %735 = vmatpush2.msra.mxu0 0.0
        %736 = vmatprep.subr.mxu0 0.0
        %737 = vmatpush2.msra.mxu0 0.0
        %738 = vmatprep.subr.mxu0 0.0
        %739 = vmatpush2.msra.mxu0 0.0
        %740 = vmatprep.subr.mxu0 0.0
        %741 = vmatpush2.msra.mxu0 0.0
        %742 = vmatprep.subr.mxu0 0.0
        %743 = vmatpush2.msra.mxu0 0.0
        %744 = vmatprep.subr.mxu0 0.0
        %745 = vmatpush2.msra.mxu0 0.0
        %746 = vmatprep.subr.mxu0 0.0
        %747 = vmatpush2.msra.mxu0 0.0
        %748 = vmatprep.subr.mxu0 0.0
        %749 = vmatpush2.msra.mxu0 0.0
        %750 = vmatprep.subr.mxu0 0.0
        %751 = vmatpush2.msra.mxu0 0.0
        %752 = vmatprep.subr.mxu0 0.0
        %753 = vmatpush2.msra.mxu0 0.0
        %754 = vmatprep.subr.mxu0 0.0
        %755 = vmatpush2.msra.mxu0 0.0
        %756 = vmatprep.subr.mxu0 0.0
        %757 = vmatpush2.msra.mxu0 0.0
        %758 = vmatprep.subr.mxu0 0.0
        %759 = vmatpush2.msra.mxu0 0.0
        %760 = vmatprep.subr.mxu0 0.0
        %761 = vmatpush2.msra.mxu0 0.0
        %762 = vmatprep.subr.mxu0 0.0
        %763 = vmatpush2.msra.mxu0 0.0
        %764 = vmatprep.mubr.f32.mxu0 0.0
        %765 = vmatmul.mubr.f32.gmra.mxu0 %v694
        %v766 = vpop.f32.mrf.mxu0
        %v767 = vadd.f32 %v690, %v766
        %v768 = vpop.f32.mrf.mxu0
        %769 = vdwg.mxu0
        %v770 = vld [vmem:[%s5] sm:$0x1]
        %v771 = vld [vmem:[#allocation2] sm:$0x1]
        %773 = vset.pattern.permute.xlu0 0
        %774 = vperm.xlu0 %773, %v771
        %v775 = vpop.permute.xlu0 %774
        %v777 = vlaneseq
        %v778 = vshrl.u32 %v777, 7
        %v779 = vsub.s32 0, %v778
        %v780 = vrot.slane %v775, %v779
        %v782 = vsel %vm692, %v770, 0
        %v785 = vsel %vm696, %v767, 0
        %787 = vmatprep.subr.mxu0 0.0
        %788 = vmatpush1.msra.mxu0 0.0
        %789 = vmatprep.subr.mxu0 0.0
        %790 = vmatpush1.msra.mxu0 0.0
        %791 = vmatprep.subr.mxu0 0.0
        %792 = vmatpush1.msra.mxu0 0.0
        %793 = vmatprep.subr.mxu0 0.0
        %794 = vmatpush1.msra.mxu0 0.0
        %795 = vmatprep.subr.mxu0 0.0
        %796 = vmatpush1.msra.mxu0 0.0
        %797 = vmatprep.subr.mxu0 0.0
        %798 = vmatpush1.msra.mxu0 0.0
        %799 = vmatprep.subr.mxu0 0.0
        %800 = vmatpush1.msra.mxu0 0.0
        %801 = vmatprep.subr.mxu0 0.0
        %802 = vmatpush1.msra.mxu0 0.0
        %803 = vmatprep.subr.mxu0 0.0
        %804 = vmatpush1.msra.mxu0 0.0
        %805 = vmatprep.subr.mxu0 0.0
        %806 = vmatpush1.msra.mxu0 0.0
        %807 = vmatprep.subr.mxu0 0.0
        %808 = vmatpush1.msra.mxu0 0.0
        %809 = vmatprep.subr.mxu0 0.0
        %810 = vmatpush1.msra.mxu0 0.0
        %811 = vmatprep.subr.mxu0 0.0
        %812 = vmatpush1.msra.mxu0 0.0
        %813 = vmatprep.subr.mxu0 0.0
        %814 = vmatpush1.msra.mxu0 0.0
        %815 = vmatprep.subr.mxu0 0.0
        %816 = vmatpush1.msra.mxu0 0.0
        %817 = vmatprep.subr.mxu0 0.0
        %818 = vmatpush1.msra.mxu0 %v785
        %819 = vmatprep.subr.mxu0 0.0
        %820 = vmatpush2.msra.mxu0 0.0
        %821 = vmatprep.subr.mxu0 0.0
        %822 = vmatpush2.msra.mxu0 0.0
        %823 = vmatprep.subr.mxu0 0.0
        %824 = vmatpush2.msra.mxu0 0.0
        %825 = vmatprep.subr.mxu0 0.0
        %826 = vmatpush2.msra.mxu0 0.0
        %827 = vmatprep.subr.mxu0 0.0
        %828 = vmatpush2.msra.mxu0 0.0
        %829 = vmatprep.subr.mxu0 0.0
        %830 = vmatpush2.msra.mxu0 0.0
        %831 = vmatprep.subr.mxu0 0.0
        %832 = vmatpush2.msra.mxu0 0.0
        %833 = vmatprep.subr.mxu0 0.0
        %834 = vmatpush2.msra.mxu0 0.0
        %835 = vmatprep.subr.mxu0 0.0
        %836 = vmatpush2.msra.mxu0 0.0
        %837 = vmatprep.subr.mxu0 0.0
        %838 = vmatpush2.msra.mxu0 0.0
        %839 = vmatprep.subr.mxu0 0.0
        %840 = vmatpush2.msra.mxu0 0.0
        %841 = vmatprep.subr.mxu0 0.0
        %842 = vmatpush2.msra.mxu0 0.0
        %843 = vmatprep.subr.mxu0 0.0
        %844 = vmatpush2.msra.mxu0 0.0
        %845 = vmatprep.subr.mxu0 0.0
        %846 = vmatpush2.msra.mxu0 0.0
        %847 = vmatprep.subr.mxu0 0.0
        %848 = vmatpush2.msra.mxu0 0.0
        %849 = vmatprep.subr.mxu0 0.0
        %850 = vmatpush2.msra.mxu0 0.0
        %851 = vmatprep.mubr.f32.mxu0 0.0
        %852 = vmatmul.mubr.f32.gmra.mxu0 %v782
        %v853 = vpop.f32.mrf.mxu0
        %v854 = vadd.f32 %v780, %v853
        %v855 = vpop.f32.mrf.mxu0
        %856 = vdwg.mxu0
        %v858 = vrot.slane %v854, 7
        %859 = vrot.lane.b32.xlu0 %v858, 120
        %v860 = vpop.permute.xlu0 %859
        %v862 = vrot.slane %v854, 6
        %863 = vrot.lane.b32.xlu0 %v862, 112
        %v864 = vpop.permute.xlu0 %863
        %v866 = vrot.slane %v854, 5
        %867 = vrot.lane.b32.xlu0 %v866, 104
        %v868 = vpop.permute.xlu0 %867
        %v870 = vrot.slane %v854, 4
        %871 = vrot.lane.b32.xlu0 %v870, 96
        %v872 = vpop.permute.xlu0 %871
        %v874 = vrot.slane %v854, 3
        %875 = vrot.lane.b32.xlu0 %v874, 88
        %v876 = vpop.permute.xlu0 %875
        %v878 = vrot.slane %v854, 2
        %879 = vrot.lane.b32.xlu0 %v878, 80
        %v880 = vpop.permute.xlu0 %879
        %v882 = vrot.slane %v854, 1
        %883 = vrot.lane.b32.xlu0 %v882, 72
        %v884 = vpop.permute.xlu0 %883
        %vm886 = vcmask 1040384
        %v887 = vsel %vm886, %v854, %v860
        %vm888 = vcmask 1041408
        %v889 = vsel %vm888, %v887, %v864
        %vm890 = vcmask 1042432
        %v891 = vsel %vm890, %v889, %v868
        %v892 = vsel %vm696, %v891, %v872
        %vm893 = vcmask 1044480
        %v894 = vsel %vm893, %v892, %v876
        %vm895 = vcmask 1045504
        %v896 = vsel %vm895, %v894, %v880
        %vm897 = vcmask 1046528
        %v898 = vsel %vm897, %v896, %v884
        %v899 = vld [vmem:[%s12] sm:$0xff]
        %v901 = vsel %vm531, %v898, 0
        %903 = vmatprep.subr.mxu0 0.0
        %904 = vmatpush1.msra.mxu0 0.0
        %905 = vmatprep.subr.mxu0 0.0
        %906 = vmatpush1.msra.mxu0 0.0
        %907 = vmatprep.subr.mxu0 0.0
        %908 = vmatpush1.msra.mxu0 0.0
        %909 = vmatprep.subr.mxu0 0.0
        %910 = vmatpush1.msra.mxu0 0.0
        %911 = vmatprep.subr.mxu0 0.0
        %912 = vmatpush1.msra.mxu0 0.0
        %913 = vmatprep.subr.mxu0 0.0
        %914 = vmatpush1.msra.mxu0 0.0
        %915 = vmatprep.subr.mxu0 0.0
        %916 = vmatpush1.msra.mxu0 0.0
        %917 = vmatprep.subr.mxu0 0.0
        %918 = vmatpush1.msra.mxu0 0.0
        %919 = vmatprep.subr.mxu0 0.0
        %920 = vmatpush1.msra.mxu0 0.0
        %921 = vmatprep.subr.mxu0 0.0
        %922 = vmatpush1.msra.mxu0 0.0
        %923 = vmatprep.subr.mxu0 0.0
        %924 = vmatpush1.msra.mxu0 0.0
        %925 = vmatprep.subr.mxu0 0.0
        %926 = vmatpush1.msra.mxu0 0.0
        %927 = vmatprep.subr.mxu0 0.0
        %928 = vmatpush1.msra.mxu0 0.0
        %929 = vmatprep.subr.mxu0 0.0
        %930 = vmatpush1.msra.mxu0 0.0
        %931 = vmatprep.subr.mxu0 0.0
        %932 = vmatpush1.msra.mxu0 0.0
        %933 = vmatprep.subr.mxu0 0.0
        %934 = vmatpush1.msra.mxu0 %v899
        %935 = vmatprep.subr.mxu0 0.0
        %936 = vmatpush2.msra.mxu0 0.0
        %937 = vmatprep.subr.mxu0 0.0
        %938 = vmatpush2.msra.mxu0 0.0
        %939 = vmatprep.subr.mxu0 0.0
        %940 = vmatpush2.msra.mxu0 0.0
        %941 = vmatprep.subr.mxu0 0.0
        %942 = vmatpush2.msra.mxu0 0.0
        %943 = vmatprep.subr.mxu0 0.0
        %944 = vmatpush2.msra.mxu0 0.0
        %945 = vmatprep.subr.mxu0 0.0
        %946 = vmatpush2.msra.mxu0 0.0
        %947 = vmatprep.subr.mxu0 0.0
        %948 = vmatpush2.msra.mxu0 0.0
        %949 = vmatprep.subr.mxu0 0.0
        %950 = vmatpush2.msra.mxu0 0.0
        %951 = vmatprep.subr.mxu0 0.0
        %952 = vmatpush2.msra.mxu0 0.0
        %953 = vmatprep.subr.mxu0 0.0
        %954 = vmatpush2.msra.mxu0 0.0
        %955 = vmatprep.subr.mxu0 0.0
        %956 = vmatpush2.msra.mxu0 0.0
        %957 = vmatprep.subr.mxu0 0.0
        %958 = vmatpush2.msra.mxu0 0.0
        %959 = vmatprep.subr.mxu0 0.0
        %960 = vmatpush2.msra.mxu0 0.0
        %961 = vmatprep.subr.mxu0 0.0
        %962 = vmatpush2.msra.mxu0 0.0
        %963 = vmatprep.subr.mxu0 0.0
        %964 = vmatpush2.msra.mxu0 0.0
        %965 = vmatprep.subr.mxu0 0.0
        %966 = vmatpush2.msra.mxu0 0.0
        %967 = vmatprep.mubr.f32.mxu0 0.0
        %968 = vmatmul.mubr.f32.gmra.mxu0 %v901
        %v969 = vpop.f32.mrf.mxu0
        %v970 = vadd.f32 0.0, %v969
        %v971 = vpop.f32.mrf.mxu0
        %972 = vdwg.mxu0
        %v973 = vld [vmem:[%s11] sm:$0xff]
        %v974 = vld [vmem:[%s11 + $0x8] sm:$0xff]
        %v975 = vld [vmem:[%s11 + $0x10] sm:$0xff]
        %v976 = vld [vmem:[%s11 + $0x18] sm:$0xff]
        %v977 = vld [vmem:[%s11 + $0x20] sm:$0xff]
        %v978 = vld [vmem:[%s11 + $0x28] sm:$0xff]
        %v979 = vld [vmem:[%s11 + $0x30] sm:$0xff]
        %v980 = vld [vmem:[%s11 + $0x38] sm:$0xff]
        %v981 = vld [vmem:[%s11 + $0x40] sm:$0xff]
        %v982 = vld [vmem:[%s11 + $0x48] sm:$0xff]
        %v983 = vld [vmem:[%s11 + $0x50] sm:$0xff]
        %v984 = vld [vmem:[%s11 + $0x58] sm:$0xff]
        %v985 = vld [vmem:[%s11 + $0x60] sm:$0xff]
        %v986 = vld [vmem:[%s11 + $0x68] sm:$0xff]
        %v987 = vld [vmem:[%s11 + $0x70] sm:$0xff]
        %v988 = vld [vmem:[%s11 + $0x78] sm:$0xff]
        %v990 = vsel %vm531, %v973, 0
        %v993 = vsel %vm531, %v974, 0
        %v996 = vsel %vm531, %v975, 0
        %v999 = vsel %vm531, %v976, 0
        %v1002 = vsel %vm531, %v977, 0
        %v1005 = vsel %vm531, %v978, 0
        %v1008 = vsel %vm531, %v979, 0
        %v1011 = vsel %vm531, %v980, 0
        %v1014 = vsel %vm531, %v981, 0
        %v1017 = vsel %vm531, %v982, 0
        %v1020 = vsel %vm531, %v983, 0
        %v1023 = vsel %vm531, %v984, 0
        %v1026 = vsel %vm531, %v985, 0
        %v1029 = vsel %vm531, %v986, 0
        %v1032 = vsel %vm531, %v987, 0
        %v1035 = vsel %vm531, %v988, 0
        %1037 = vmatprep.subr.mxu0 0.0
        %1038 = vmatpush1.msra.mxu0 0.0
        %1039 = vmatprep.subr.mxu0 0.0
        %1040 = vmatpush1.msra.mxu0 0.0
        %1041 = vmatprep.subr.mxu0 0.0
        %1042 = vmatpush1.msra.mxu0 0.0
        %1043 = vmatprep.subr.mxu0 0.0
        %1044 = vmatpush1.msra.mxu0 0.0
        %1045 = vmatprep.subr.mxu0 0.0
        %1046 = vmatpush1.msra.mxu0 0.0
        %1047 = vmatprep.subr.mxu0 0.0
        %1048 = vmatpush1.msra.mxu0 0.0
        %1049 = vmatprep.subr.mxu0 0.0
        %1050 = vmatpush1.msra.mxu0 0.0
        %1051 = vmatprep.subr.mxu0 0.0
        %1052 = vmatpush1.msra.mxu0 0.0
        %1053 = vmatprep.subr.mxu0 0.0
        %1054 = vmatpush1.msra.mxu0 0.0
        %1055 = vmatprep.subr.mxu0 0.0
        %1056 = vmatpush1.msra.mxu0 0.0
        %1057 = vmatprep.subr.mxu0 0.0
        %1058 = vmatpush1.msra.mxu0 0.0
        %1059 = vmatprep.subr.mxu0 0.0
        %1060 = vmatpush1.msra.mxu0 0.0
        %1061 = vmatprep.subr.mxu0 0.0
        %1062 = vmatpush1.msra.mxu0 0.0
        %1063 = vmatprep.subr.mxu0 0.0
        %1064 = vmatpush1.msra.mxu0 0.0
        %1065 = vmatprep.subr.mxu0 0.0
        %1066 = vmatpush1.msra.mxu0 0.0
        %1067 = vmatprep.subr.mxu0 0.0
        %1068 = vmatpush1.msra.mxu0 %v970
        %1069 = vmatprep.subr.mxu0 0.0
        %1070 = vmatpush2.msra.mxu0 0.0
        %1071 = vmatprep.subr.mxu0 0.0
        %1072 = vmatpush2.msra.mxu0 0.0
        %1073 = vmatprep.subr.mxu0 0.0
        %1074 = vmatpush2.msra.mxu0 0.0
        %1075 = vmatprep.subr.mxu0 0.0
        %1076 = vmatpush2.msra.mxu0 0.0
        %1077 = vmatprep.subr.mxu0 0.0
        %1078 = vmatpush2.msra.mxu0 0.0
        %1079 = vmatprep.subr.mxu0 0.0
        %1080 = vmatpush2.msra.mxu0 0.0
        %1081 = vmatprep.subr.mxu0 0.0
        %1082 = vmatpush2.msra.mxu0 0.0
        %1083 = vmatprep.subr.mxu0 0.0
        %1084 = vmatpush2.msra.mxu0 0.0
        %1085 = vmatprep.subr.mxu0 0.0
        %1086 = vmatpush2.msra.mxu0 0.0
        %1087 = vmatprep.subr.mxu0 0.0
        %1088 = vmatpush2.msra.mxu0 0.0
        %1089 = vmatprep.subr.mxu0 0.0
        %1090 = vmatpush2.msra.mxu0 0.0
        %1091 = vmatprep.subr.mxu0 0.0
        %1092 = vmatpush2.msra.mxu0 0.0
        %1093 = vmatprep.subr.mxu0 0.0
        %1094 = vmatpush2.msra.mxu0 0.0
        %1095 = vmatprep.subr.mxu0 0.0
        %1096 = vmatpush2.msra.mxu0 0.0
        %1097 = vmatprep.subr.mxu0 0.0
        %1098 = vmatpush2.msra.mxu0 0.0
        %1099 = vmatprep.subr.mxu0 0.0
        %1100 = vmatpush2.msra.mxu0 0.0
        %1101 = vmatprep.mubr.f32.mxu0 0.0
        %1102 = vmatmul.mubr.f32.gmra.mxu0 %v990
        %v1103 = vpop.f32.mrf.mxu0
        %v1104 = vadd.f32 0.0, %v1103
        %v1105 = vpop.f32.mrf.mxu0
        %1106 = vmatprep.mubr.f32.mxu0 0.0
        %1107 = vmatmul.mubr.f32.gmra.mxu0 %v993
        %v1108 = vpop.f32.mrf.mxu0
        %v1109 = vadd.f32 0.0, %v1108
        %v1110 = vpop.f32.mrf.mxu0
        %1111 = vmatprep.mubr.f32.mxu0 0.0
        %1112 = vmatmul.mubr.f32.gmra.mxu0 %v996
        %v1113 = vpop.f32.mrf.mxu0
        %v1114 = vadd.f32 0.0, %v1113
        %v1115 = vpop.f32.mrf.mxu0
        %1116 = vmatprep.mubr.f32.mxu0 0.0
        %1117 = vmatmul.mubr.f32.gmra.mxu0 %v999
        %v1118 = vpop.f32.mrf.mxu0
        %v1119 = vadd.f32 0.0, %v1118
        %v1120 = vpop.f32.mrf.mxu0
        %1121 = vmatprep.mubr.f32.mxu0 0.0
        %1122 = vmatmul.mubr.f32.gmra.mxu0 %v1002
        %v1123 = vpop.f32.mrf.mxu0
        %v1124 = vadd.f32 0.0, %v1123
        %v1125 = vpop.f32.mrf.mxu0
        %1126 = vmatprep.mubr.f32.mxu0 0.0
        %1127 = vmatmul.mubr.f32.gmra.mxu0 %v1005
        %v1128 = vpop.f32.mrf.mxu0
        %v1129 = vadd.f32 0.0, %v1128
        %v1130 = vpop.f32.mrf.mxu0
        %1131 = vmatprep.mubr.f32.mxu0 0.0
        %1132 = vmatmul.mubr.f32.gmra.mxu0 %v1008
        %v1133 = vpop.f32.mrf.mxu0
        %v1134 = vadd.f32 0.0, %v1133
        %v1135 = vpop.f32.mrf.mxu0
        %1136 = vmatprep.mubr.f32.mxu0 0.0
        %1137 = vmatmul.mubr.f32.gmra.mxu0 %v1011
        %v1138 = vpop.f32.mrf.mxu0
        %v1139 = vadd.f32 0.0, %v1138
        %v1140 = vpop.f32.mrf.mxu0
        %1141 = vmatprep.mubr.f32.mxu0 0.0
        %1142 = vmatmul.mubr.f32.gmra.mxu0 %v1014
        %v1143 = vpop.f32.mrf.mxu0
        %v1144 = vadd.f32 0.0, %v1143
        %v1145 = vpop.f32.mrf.mxu0
        %1146 = vmatprep.mubr.f32.mxu0 0.0
        %1147 = vmatmul.mubr.f32.gmra.mxu0 %v1017
        %v1148 = vpop.f32.mrf.mxu0
        %v1149 = vadd.f32 0.0, %v1148
        %v1150 = vpop.f32.mrf.mxu0
        %1151 = vmatprep.mubr.f32.mxu0 0.0
        %1152 = vmatmul.mubr.f32.gmra.mxu0 %v1020
        %v1153 = vpop.f32.mrf.mxu0
        %v1154 = vadd.f32 0.0, %v1153
        %v1155 = vpop.f32.mrf.mxu0
        %1156 = vmatprep.mubr.f32.mxu0 0.0
        %1157 = vmatmul.mubr.f32.gmra.mxu0 %v1023
        %v1158 = vpop.f32.mrf.mxu0
        %v1159 = vadd.f32 0.0, %v1158
        %v1160 = vpop.f32.mrf.mxu0
        %1161 = vmatprep.mubr.f32.mxu0 0.0
        %1162 = vmatmul.mubr.f32.gmra.mxu0 %v1026
        %v1163 = vpop.f32.mrf.mxu0
        %v1164 = vadd.f32 0.0, %v1163
        %v1165 = vpop.f32.mrf.mxu0
        %1166 = vmatprep.mubr.f32.mxu0 0.0
        %1167 = vmatmul.mubr.f32.gmra.mxu0 %v1029
        %v1168 = vpop.f32.mrf.mxu0
        %v1169 = vadd.f32 0.0, %v1168
        %v1170 = vpop.f32.mrf.mxu0
        %1171 = vmatprep.mubr.f32.mxu0 0.0
        %1172 = vmatmul.mubr.f32.gmra.mxu0 %v1032
        %v1173 = vpop.f32.mrf.mxu0
        %v1174 = vadd.f32 0.0, %v1173
        %v1175 = vpop.f32.mrf.mxu0
        %1176 = vmatprep.mubr.f32.mxu0 0.0
        %1177 = vmatmul.mubr.f32.gmra.mxu0 %v1035
        %v1178 = vpop.f32.mrf.mxu0
        %v1179 = vadd.f32 0.0, %v1178
        %v1180 = vpop.f32.mrf.mxu0
        %1181 = vdwg.mxu0
        %1182 = vst [vmem:[%s435] sm:$0xff] %v1104
        %1183 = vst [vmem:[%s435 + $0x8] sm:$0xff] %v1109
        %1184 = vst [vmem:[%s435 + $0x10] sm:$0xff] %v1114
        %1185 = vst [vmem:[%s435 + $0x18] sm:$0xff] %v1119
        %1186 = vst [vmem:[%s435 + $0x20] sm:$0xff] %v1124
        %1187 = vst [vmem:[%s435 + $0x28] sm:$0xff] %v1129
        %1188 = vst [vmem:[%s435 + $0x30] sm:$0xff] %v1134
        %1189 = vst [vmem:[%s435 + $0x38] sm:$0xff] %v1139
        %1190 = vst [vmem:[%s435 + $0x40] sm:$0xff] %v1144
        %1191 = vst [vmem:[%s435 + $0x48] sm:$0xff] %v1149
        %1192 = vst [vmem:[%s435 + $0x50] sm:$0xff] %v1154
        %1193 = vst [vmem:[%s435 + $0x58] sm:$0xff] %v1159
        %1194 = vst [vmem:[%s435 + $0x60] sm:$0xff] %v1164
        %1195 = vst [vmem:[%s435 + $0x68] sm:$0xff] %v1169
        %1196 = vst [vmem:[%s435 + $0x70] sm:$0xff] %v1174
        %1197 = vst [vmem:[%s435 + $0x78] sm:$0xff] %v1179
        %s1198 = sand.u32 %s315, 1
        %s1199 = scalar_lea.sflag [#allocation4], %s1198
        %s1200 = sand.u32 %s315, 1
        %s1201 = smul.addr %s1200, 128
        %s1202 = scalar_lea.vmem [#allocation3], %s1201
        // Predicated region
        $region73: #{conv_decoder_forward.1} parent=71 // pred_check
          %p1203 = pneg %p325
        $region74: #{conv_decoder_forward.1} parent=71 // pred_check_branch
          %1205 = sbr.rel (%p1203) target = $region76
        $region75: #{conv_decoder_forward.1} parent=71 // pred_region
          %s1207 = ssub.s32 2048, 2048
          %1208 = vsyncadd %s1199, %s1207
          %s1209 = smul.addr %s29, 16
          %s1210 = smul.addr %s1209, 128
          %s1211 = scalar_lea.hbm %s13, %s1210
          %s1212 = sshll.u32 %s1202, 4
          %s1213 = int_to_ptr.vmem [resolvable:$true] %s1212
          %1218 = dma.vmem_to_hbm [thread:$0]  %s1213, 2048, %s1211, %s1199, 128, 128, 8
        $region76: #{conv_decoder_forward.1} parent=71 // pred_fallthru
          _
      $region72: #{conv_decoder_forward.1} parent=5 // pred_fallthru
        _
      %p1219 = scmp.le.s32.totalorder 2, %s24
      // Predicated region
      $region77: #{conv_decoder_forward.1} parent=5 // pred_check
        %p1220 = pneg %p1219
      $region78: #{conv_decoder_forward.1} parent=5 // pred_check_branch
        %1222 = sbr.rel (%p1220) target = $region80
      $region79: #{conv_decoder_forward.1} parent=5 // pred_region
        %s1223 = ssub.s32 %s24, 2
        // Predicated region
        $region81: #{conv_decoder_forward.1} parent=79 // pred_check
          %p1224 = pneg %p331
        $region82: #{conv_decoder_forward.1} parent=79 // pred_check_branch
          %1226 = sbr.rel (%p1224) target = $region84
        $region83: #{conv_decoder_forward.1} parent=79 // pred_region
          %s1227 = sand.u32 %s316, 1
          %s1228 = scalar_lea.sflag [#allocation4], %s1227
          %s1229 = sand.u32 %s316, 1
          %s1230 = smul.addr %s1229, 128
          %s1231 = scalar_lea.vmem [#allocation3], %s1230
          %1232 = dma.done %s1228, 2048
        $region84: #{conv_decoder_forward.1} parent=79 // pred_fallthru
          _
      $region80: #{conv_decoder_forward.1} parent=5 // pred_fallthru
        _
    $region6: #{conv_decoder_forward.1} parent=1 // loop_footer
      %s28 = sadd.s32 1, %s24
    $region7: #{conv_decoder_forward.1} parent=1 // loop_footer_branch
      %23 = sbr.rel target = $region3
    $region8: #{conv_decoder_forward.1} parent=1 // loop_exit
      _
    %1233 = vsyncpa [#allocation4], 1
    %s1234 = scalar_lea.sflag [#allocation4], 1
    %1235 = vsyncpa %s1234, 1

</llo_original>
